<compile_context>
chip_gen: v7x
topology: tpu7x:2x2x1
jax: 0.10.0
libtpu: 0.0.40
codegen_flags: <defaults>
</compile_context>

<pallas_src>
import jax
import jax.numpy as jnp
import numpy as np
from jax.experimental import pallas as pl
from jax.experimental.pallas import tpu as pltpu

HID = 4                       # LSTM hidden size
OBS = 4                       # observation dim
IN_DIM = 2 * HID + OBS        # 12 : [h | c | obs]
GATES = 4 * HID               # 16 : stacked gate rows (i|f|o|g after reorder)
COL_BIAS = IN_DIM             # 12 : fused gate-bias column
COL_WV = IN_DIM + 1           # 13 : value-head weight column (rows 0:4)
COL_BV = IN_DIM + 2           # 14 : value-head bias (row 0)
W_LANES = 128                 # weight slab padded to a full lane tile
LANE = 128
MAX_B_TILE = 2048             # lanes per grid step


def value_kernel(x_ref, w_ref, v_ref):
    """One LSTM-cell step + Linear(4->1), batch on the lane axis.

    x_ref: [12, Bt]  = [h | c | obs]^T
    w_ref: [16, 128] packed weights:
        [:, 0:12]   fused gate matrix (cols: h, zeros-for-c, obs; rows i|f|o|g)
        [:, 12]     fused gate bias (b_ih + b_hh)
        [0:4, 13]   value-head weight (w_v)
        [0,   14]   value-head bias
    v_ref: [1, Bt]   lane-dense value row
    """
    xT = x_ref[...]                                   # [12, Bt]
    wg = w_ref[:, 0:IN_DIM]                           # [16, 12]
    bg = w_ref[:, COL_BIAS:COL_BIAS + 1]              # [16, 1]
    wv = w_ref[0:HID, COL_WV:COL_WV + 1]              # [4, 1]
    bv = w_ref[0:1, COL_BV:COL_BV + 1]                # [1, 1]

    # One MXU matmul for all gates of the whole tile (batch on lanes).
    gates = jnp.dot(wg, xT, preferred_element_type=jnp.float32) + bg  # [16, Bt]

    # Sigmoid gates (i|f|o) are contiguous rows 0:12; g is rows 12:16.
    # sigmoid(x) = 0.5*tanh(x/2) + 0.5 keeps everything on the EUP, no divide.
    sig = 0.5 * jnp.tanh(0.5 * gates[0:3 * HID, :]) + 0.5             # [12, Bt]
    g_g = jnp.tanh(gates[3 * HID:4 * HID, :])                         # [4, Bt]

    i_g = sig[0 * HID:1 * HID, :]
    f_g = sig[1 * HID:2 * HID, :]
    o_g = sig[2 * HID:3 * HID, :]

    c0 = xT[HID:2 * HID, :]                                           # [4, Bt]
    c_new = f_g * c0 + i_g * g_g
    h_new = o_g * jnp.tanh(c_new)                                     # [4, Bt]

    # Value head Linear(4 -> 1): VPU broadcast-mul + 4-row sublane reduce.
    v_ref[...] = jnp.sum(h_new * wv, axis=0, keepdims=True) + bv      # [1, Bt]


def init_params(key):
    """PyTorch-style default init U(-1/sqrt(H), 1/sqrt(H)) for LSTM and Linear."""
    bound = 1.0 / float(np.sqrt(HID))
    ks = jax.random.split(key, 6)
    return dict(
        w_ih=jax.random.uniform(ks[0], (4 * HID, OBS), jnp.float32, -bound, bound),
        w_hh=jax.random.uniform(ks[1], (4 * HID, HID), jnp.float32, -bound, bound),
        b_ih=jax.random.uniform(ks[2], (4 * HID,), jnp.float32, -bound, bound),
        b_hh=jax.random.uniform(ks[3], (4 * HID,), jnp.float32, -bound, bound),
        w_v=jax.random.uniform(ks[4], (1, HID), jnp.float32, -bound, bound),
        b_v=jax.random.uniform(ks[5], (1,), jnp.float32, -bound, bound),
    )


def pack_weights(params):
    """Host-side one-time packing into a single (8,128)-aligned [16,128] slab.

    PyTorch LSTM: gates = obs @ W_ih.T + h @ W_hh.T + b_ih + b_hh with gate
    rows ordered i|f|g|o.  We build Wg so that gates^T = Wg @ [h|c|obs]^T + b,
    with gate rows reordered to i|f|o|g (sigmoid rows contiguous) and the c
    columns zero (c never feeds the gates).
    """
    w_ih = np.asarray(params["w_ih"], np.float32)   # [16, 4]
    w_hh = np.asarray(params["w_hh"], np.float32)   # [16, 4]
    b = np.asarray(params["b_ih"], np.float32) + np.asarray(params["b_hh"], np.float32)
    w_v = np.asarray(params["w_v"], np.float32)     # [1, 4]
    b_v = np.asarray(params["b_v"], np.float32)     # [1]

    # PyTorch gate order i|f|g|o  ->  i|f|o|g (sigmoid gates contiguous).
    perm = np.concatenate([np.arange(0, 2 * HID),
                           np.arange(3 * HID, 4 * HID),
                           np.arange(2 * HID, 3 * HID)])

    packed = np.zeros((GATES, W_LANES), np.float32)
    packed[:, 0:HID] = w_hh[perm]                 # h contribution (input cols 0:4)
    # columns HID:2*HID stay zero (c contributes nothing to the gates)
    packed[:, 2 * HID:IN_DIM] = w_ih[perm]        # obs contribution (cols 8:12)
    packed[:, COL_BIAS] = b[perm]                 # fused gate bias
    packed[0:HID, COL_WV] = w_v[0]                # value-head weight
    packed[0, COL_BV] = b_v[0]                    # value-head bias
    return jnp.asarray(packed)


def _round_up(n, m):
    return ((n + m - 1) // m) * m


def value_net_forward(inputs, w_packed):
    """inputs: [B, 12] f32; w_packed: [16, 128] f32.  Returns value [B, 1]."""
    B = inputs.shape[0]
    b_pad = _round_up(max(B, 1), LANE)
    if b_pad <= MAX_B_TILE:
        tile = b_pad
    else:
        tile = MAX_B_TILE
        b_pad = _round_up(B, tile)

    xT = inputs.T                                        # [12, B]: batch on lanes
    if b_pad != B:
        xT = jnp.pad(xT, ((0, 0), (0, b_pad - B)))

    out = pl.pallas_call(
        value_kernel,
        out_shape=jax.ShapeDtypeStruct((1, b_pad), jnp.float32),
        grid=(b_pad // tile,),
        in_specs=[
            pl.BlockSpec((IN_DIM, tile), lambda i: (0, i)),     # streamed batch tile
            pl.BlockSpec((GATES, W_LANES), lambda i: (0, 0)),   # resident weights
        ],
        out_specs=pl.BlockSpec((1, tile), lambda i: (0, i)),    # lane-dense output
        compiler_params=pltpu.CompilerParams(
            dimension_semantics=("parallel",)),
    )(xT, w_packed)
    return out[:, :B].T                                  # [B, 1]


def reference_value(inputs, params):
    """Pure-JAX reference of ValueNet.forward for correctness checking."""
    h0 = inputs[:, 0:HID]
    c0 = inputs[:, HID:2 * HID]
    obs = inputs[:, 2 * HID:]
    gates = (obs @ params["w_ih"].T + h0 @ params["w_hh"].T
             + params["b_ih"] + params["b_hh"])
    i_g = jax.nn.sigmoid(gates[:, 0 * HID:1 * HID])
    f_g = jax.nn.sigmoid(gates[:, 1 * HID:2 * HID])
    g_g = jnp.tanh(gates[:, 2 * HID:3 * HID])
    o_g = jax.nn.sigmoid(gates[:, 3 * HID:4 * HID])
    c1 = f_g * c0 + i_g * g_g
    h1 = o_g * jnp.tanh(c1)
    return h1 @ params["w_v"].T + params["b_v"]


if __name__ == "__main__":
    key = jax.random.PRNGKey(0)
    pkey, xkey, xkey2 = jax.random.split(key, 3)
    params = init_params(pkey)
    w_packed = pack_weights(params)          # packed once, outside the jitted path

    fwd = jax.jit(value_net_forward)

    # Small shape consistent with the module: batch=2, feature=12.
    B = 2
    inputs = jax.random.normal(xkey, (B, IN_DIM), jnp.float32)
    value = fwd(inputs, w_packed)
    jax.block_until_ready(value)
    assert value.shape == (B, 1)
    ref = reference_value(inputs, params)
    assert jnp.allclose(value, ref, rtol=1e-3, atol=1e-3), (value, ref)

    # Larger batch exercising the multi-tile grid + lane-padding path.
    B2 = 2500
    inputs2 = jax.random.normal(xkey2, (B2, IN_DIM), jnp.float32)
    value2 = fwd(inputs2, w_packed)
    jax.block_until_ready(value2)
    assert value2.shape == (B2, 1)
    ref2 = reference_value(inputs2, params)
    assert jnp.allclose(value2, ref2, rtol=1e-3, atol=1e-3)

    print("KERNEL_OK")
</pallas_src>

<mosaic_0001>
module attributes {stable_mosaic.version = 11 : i64} {
  func.func @value_kernel(%arg0: i32, %arg1: memref<12x128xf32, #tpu.memory_space<vmem>>, %arg2: memref<16x128xf32, #tpu.memory_space<vmem>>, %arg3: memref<1x128xf32, #tpu.memory_space<vmem>>) attributes {dimension_semantics = [#tpu.dimension_semantics<parallel>], iteration_bounds = array<i64: 1>, scalar_prefetch = 0 : i64, scratch_operands = 0 : i64, tpu.core_type = #tpu.core_type<tc>, window_params = [{transform_indices = @transform_0, window_bounds = array<i64: 12, 128>}, {pipeline_mode = #tpu.pipeline_mode<synchronous>, transform_indices = @transform_1, window_bounds = array<i64: 16, 128>}, {transform_indices = @transform_2, window_bounds = array<i64: 1, 128>}]} {
    %c0 = arith.constant 0 : index
    %c0_0 = arith.constant 0 : index
    %0 = vector.load %arg1[%c0, %c0_0] : memref<12x128xf32, #tpu.memory_space<vmem>>, vector<12x128xf32>
    %c0_1 = arith.constant 0 : index
    %c0_2 = arith.constant 0 : index
    %1 = vector.load %arg2[%c0_1, %c0_2] : memref<16x128xf32, #tpu.memory_space<vmem>>, vector<16x12xf32>
    %c0_3 = arith.constant 0 : index
    %c12 = arith.constant 12 : index
    %2 = vector.load %arg2[%c0_3, %c12] : memref<16x128xf32, #tpu.memory_space<vmem>>, vector<16x1xf32>
    %c0_4 = arith.constant 0 : index
    %c13 = arith.constant 13 : index
    %3 = vector.load %arg2[%c0_4, %c13] : memref<16x128xf32, #tpu.memory_space<vmem>>, vector<4x1xf32>
    %c0_5 = arith.constant 0 : index
    %c14 = arith.constant 14 : index
    %4 = vector.load %arg2[%c0_5, %c14] : memref<16x128xf32, #tpu.memory_space<vmem>>, vector<1x1xf32>
    %cst = arith.constant dense<0.000000e+00> : vector<16x128xf32>
    %5 = tpu.matmul %1, %0, %cst {dimension_numbers = #tpu.dot_dimension_numbers<[1], [0], [0], [1], [0, 0, 1, 1], [], []>} : vector<16x12xf32>, vector<12x128xf32>, vector<16x128xf32> -> vector<16x128xf32>
    %6 = vector.broadcast %2 : vector<16x1xf32> to vector<16x128xf32>
    %7 = arith.addf %5, %6 : vector<16x128xf32>
    %8 = vector.extract_strided_slice %7 {offsets = [0, 0], sizes = [12, 128], strides = [1, 1]} : vector<16x128xf32> to vector<12x128xf32>
    %cst_6 = arith.constant 5.000000e-01 : f32
    %9 = vector.broadcast %cst_6 : f32 to vector<12x128xf32>
    %10 = arith.mulf %9, %8 : vector<12x128xf32>
    %11 = math.tanh %10 : vector<12x128xf32>
    %cst_7 = arith.constant 5.000000e-01 : f32
    %12 = vector.broadcast %cst_7 : f32 to vector<12x128xf32>
    %13 = arith.mulf %12, %11 : vector<12x128xf32>
    %cst_8 = arith.constant 5.000000e-01 : f32
    %14 = vector.broadcast %cst_8 : f32 to vector<12x128xf32>
    %15 = arith.addf %13, %14 : vector<12x128xf32>
    %16 = vector.extract_strided_slice %7 {offsets = [12, 0], sizes = [4, 128], strides = [1, 1]} : vector<16x128xf32> to vector<4x128xf32>
    %17 = math.tanh %16 : vector<4x128xf32>
    %18 = vector.extract_strided_slice %15 {offsets = [0, 0], sizes = [4, 128], strides = [1, 1]} : vector<12x128xf32> to vector<4x128xf32>
    %19 = vector.extract_strided_slice %15 {offsets = [4, 0], sizes = [4, 128], strides = [1, 1]} : vector<12x128xf32> to vector<4x128xf32>
    %20 = vector.extract_strided_slice %15 {offsets = [8, 0], sizes = [4, 128], strides = [1, 1]} : vector<12x128xf32> to vector<4x128xf32>
    %21 = vector.extract_strided_slice %0 {offsets = [4, 0], sizes = [4, 128], strides = [1, 1]} : vector<12x128xf32> to vector<4x128xf32>
    %22 = arith.mulf %19, %21 : vector<4x128xf32>
    %23 = arith.mulf %18, %17 : vector<4x128xf32>
    %24 = arith.addf %22, %23 : vector<4x128xf32>
    %25 = math.tanh %24 : vector<4x128xf32>
    %26 = arith.mulf %20, %25 : vector<4x128xf32>
    %27 = vector.broadcast %3 : vector<4x1xf32> to vector<4x128xf32>
    %28 = arith.mulf %26, %27 : vector<4x128xf32>
    %cst_9 = arith.constant dense<0.000000e+00> : vector<128xf32>
    %29 = vector.multi_reduction <add>, %28, %cst_9 [0] : vector<4x128xf32> to vector<128xf32>
    %30 = vector.shape_cast %29 : vector<128xf32> to vector<1x128xf32>
    %31 = vector.broadcast %4 : vector<1x1xf32> to vector<1x128xf32>
    %32 = arith.addf %30, %31 : vector<1x128xf32>
    %c0_10 = arith.constant 0 : index
    %c0_11 = arith.constant 0 : index
    %33 = vector.load %arg3[%c0_10, %c0_11] : memref<1x128xf32, #tpu.memory_space<vmem>>, vector<1x128xf32>
    tpu.vector_store %arg3[%c0_10, %c0_11], %32 {strides = array<i32>} : memref<1x128xf32, #tpu.memory_space<vmem>>, vector<1x128xf32>,
    return
  }
  func.func @transform_0(%arg0: i32) -> (i32, i32) {
    %c0_i32 = arith.constant 0 : i32
    %c0_i32_0 = arith.constant 0 : i32
    return %c0_i32, %arg0 : i32, i32
  }
  func.func @transform_1(%arg0: i32) -> (i32, i32) {
    %c0_i32 = arith.constant 0 : i32
    %c0_i32_0 = arith.constant 0 : i32
    %c0_i32_1 = arith.constant 0 : i32
    return %c0_i32, %c0_i32_0 : i32, i32
  }
  func.func @transform_2(%arg0: i32) -> (i32, i32) {
    %c0_i32 = arith.constant 0 : i32
    %c0_i32_0 = arith.constant 0 : i32
    return %c0_i32, %arg0 : i32, i32
  }
}

</mosaic_0001>

<llo_original>
// kernel: value_net_forward.1
$region0: #{value_net_forward.1}
  #allocation0 [shape = 'u32[]', space=smem, size = 0x4, offset = 0x4, fixed_abs, tag = 'smem constant byte address 0x4 - core index']
  #allocation1 [shape = 'u32[144,128]{1,0:T(1,128)}', space=vmem, size = 0x12000, scoped, tag = 'internal scratch']
  %s0 = inlined_call_operand.vmem [shape: f32[12,128], index: 0, kind: input, shape index: {}]
  %s1 = inlined_call_operand.vmem [shape: f32[16,128], index: 1, kind: input, shape index: {}]
  %s2 = inlined_call_operand.vmem [shape: f32[1,128], index: 2, kind: output, shape index: {}]
  %s3 = sld [smem:[#allocation0]]
  $region18: #{value_net_forward.1} parent=0
    _
  %s5 = ssub.s32 1, %s3
  %s6 = scalar_select 0, %s5, %s3
  // Predicated region
  $region2: #{value_net_forward.1} parent=0 // pred_check
    _
  $region3: #{value_net_forward.1} parent=0 // pred_check_branch
    %8 = sbr.rel (0) target = $region5
  $region4: #{value_net_forward.1} parent=0 // pred_region
    _
  $region5: #{value_net_forward.1} parent=0 // pred_fallthru
    _
  // Predicated region
  $region6: #{value_net_forward.1} parent=0 // pred_check
    _
  $region7: #{value_net_forward.1} parent=0 // pred_check_branch
    %10 = sbr.rel (0) target = $region9
  $region8: #{value_net_forward.1} parent=0 // pred_region
    _
  $region9: #{value_net_forward.1} parent=0 // pred_fallthru
    _
  %v11 = vld [vmem:[%s0] sm:$0xff]
  %v12 = vld [vmem:[%s0 + $0x8] sm:$0xf]
  %v13 = vld [vmem:[%s1] sm:$0xff]
  %v14 = vld [vmem:[%s1 + $0x8] sm:$0xff]
  %v15 = vld [vmem:[%s1] sm:$0xf]
  %v16 = vld [vmem:[%s1] sm:$0x1]
  %18 = vset.pattern.permute.xlu0 12
  %19 = vperm.xlu0 %18, %v13
  %v20 = vpop.permute.xlu0 %19
  %23 = vset.pattern.permute.xlu0 12
  %24 = vperm.xlu0 %23, %v14
  %v25 = vpop.permute.xlu0 %24
  %vm27 = vcmask 97280
  %v28 = vsel %vm27, %v13, 0
  %v30 = vsel %vm27, %v14, 0
  %vm32 = vcmask 1043456
  %v34 = vsel %vm32, %v12, 0
  %36 = vmatprep.subr.mxu0 0.0
  %37 = vmatpush1.msra.mxu0 %v11
  %38 = vmatprep.subr.mxu0 0.0
  %39 = vmatpush1.msra.mxu0 %v34
  %40 = vmatprep.subr.mxu0 0.0
  %41 = vmatpush1.msra.mxu0 0.0
  %42 = vmatprep.subr.mxu0 0.0
  %43 = vmatpush1.msra.mxu0 0.0
  %44 = vmatprep.subr.mxu0 0.0
  %45 = vmatpush1.msra.mxu0 0.0
  %46 = vmatprep.subr.mxu0 0.0
  %47 = vmatpush1.msra.mxu0 0.0
  %48 = vmatprep.subr.mxu0 0.0
  %49 = vmatpush1.msra.mxu0 0.0
  %50 = vmatprep.subr.mxu0 0.0
  %51 = vmatpush1.msra.mxu0 0.0
  %52 = vmatprep.subr.mxu0 0.0
  %53 = vmatpush1.msra.mxu0 0.0
  %54 = vmatprep.subr.mxu0 0.0
  %55 = vmatpush1.msra.mxu0 0.0
  %56 = vmatprep.subr.mxu0 0.0
  %57 = vmatpush1.msra.mxu0 0.0
  %58 = vmatprep.subr.mxu0 0.0
  %59 = vmatpush1.msra.mxu0 0.0
  %60 = vmatprep.subr.mxu0 0.0
  %61 = vmatpush1.msra.mxu0 0.0
  %62 = vmatprep.subr.mxu0 0.0
  %63 = vmatpush1.msra.mxu0 0.0
  %64 = vmatprep.subr.mxu0 0.0
  %65 = vmatpush1.msra.mxu0 0.0
  %66 = vmatprep.subr.mxu0 0.0
  %67 = vmatpush1.msra.mxu0 0.0
  %68 = vmatprep.subr.mxu0 0.0
  %69 = vmatpush1.msra.mxu0 0.0
  %70 = vmatprep.subr.mxu0 0.0
  %71 = vmatpush1.msra.mxu0 0.0
  %72 = vmatprep.subr.mxu0 0.0
  %73 = vmatpush1.msra.mxu0 0.0
  %74 = vmatprep.subr.mxu0 0.0
  %75 = vmatpush1.msra.mxu0 0.0
  %76 = vmatprep.subr.mxu0 0.0
  %77 = vmatpush1.msra.mxu0 0.0
  %78 = vmatprep.subr.mxu0 0.0
  %79 = vmatpush1.msra.mxu0 0.0
  %80 = vmatprep.subr.mxu0 0.0
  %81 = vmatpush1.msra.mxu0 0.0
  %82 = vmatprep.subr.mxu0 0.0
  %83 = vmatpush1.msra.mxu0 0.0
  %84 = vmatprep.subr.mxu0 0.0
  %85 = vmatpush1.msra.mxu0 0.0
  %86 = vmatprep.subr.mxu0 0.0
  %87 = vmatpush1.msra.mxu0 0.0
  %88 = vmatprep.subr.mxu0 0.0
  %89 = vmatpush1.msra.mxu0 0.0
  %90 = vmatprep.subr.mxu0 0.0
  %91 = vmatpush1.msra.mxu0 0.0
  %92 = vmatprep.subr.mxu0 0.0
  %93 = vmatpush1.msra.mxu0 0.0
  %94 = vmatprep.subr.mxu0 0.0
  %95 = vmatpush1.msra.mxu0 0.0
  %96 = vmatprep.subr.mxu0 0.0
  %97 = vmatpush1.msra.mxu0 0.0
  %98 = vmatprep.subr.mxu0 0.0
  %99 = vmatpush1.msra.mxu0 0.0
  %100 = vmatprep.mubr.f32.mxu0 0.0
  %101 = vmatmul.mubr.f32.gmra.mrb[0].mxu0 %v28
  %v102 = vpop.f32.mrb[0].mxu0
  %v103 = vadd.f32 %v20, %v102
  %v104 = vpop.f32.mrb[0].mxu0
  %105 = vmatprep.mubr.f32.mxu0 0.0
  %106 = vmatmul.mubr.f32.gmra.mrb[0].mxu0 %v30
  %v107 = vpop.f32.mrb[0].mxu0
  %v108 = vadd.f32 %v25, %v107
  %v109 = vpop.f32.mrb[0].mxu0
  %110 = vdwg.mxu0
  %v111 = vmul.f32 %v103, 0.5
  %v112 = vmul.f32 %v108, 0.5
  %v113 = vtanh.pop %v111
  %v114 = vtanh.pop %v112
  %v115 = vmul.f32 %v113, 0.5
  %v116 = vmul.f32 %v114, 0.5
  %v117 = vadd.f32 %v115, 0.5
  %v118 = vadd.f32 %v116, 0.5
  %v119 = vtanh.pop %v108
  %v120 = vmul.f32 %v117, %v11
  %v122 = vrot.slane %v119, 4
  %v124 = vmul.f32 %v117, %v122
  %v126 = vrot.slane %v124, 4
  %v128 = vadd.f32 %v120, %v126
  %v129 = vtanh.pop %v128
  %v131 = vrot.slane %v129, 4
  %v133 = vmul.f32 %v118, %v131
  %135 = vset.pattern.permute.xlu0 13
  %136 = vperm.xlu0 %135, %v15
  %v137 = vpop.permute.xlu0 %136
  %v139 = vmul.f32 %v133, %v137
  %v140 = vsel %vm32, %v139, 0.0
  %v141 = vrot.slane %v140, 4
  %v142 = vadd.f32 %v140, %v141
  %v143 = vrot.slane %v142, 2
  %v144 = vadd.f32 %v142, %v143
  %v145 = vrot.slane %v144, 1
  %v146 = vadd.f32 %v144, %v145
  %148 = vset.pattern.permute.xlu0 14
  %149 = vperm.xlu0 %148, %v16
  %v150 = vpop.permute.xlu0 %149
  %v152 = vadd.f32 %v146, %v150
  %153 = vst [vmem:[%s2] sm:$0x1] %v152
  // Predicated region
  $region10: #{value_net_forward.1} parent=0 // pred_check
    _
  $region11: #{value_net_forward.1} parent=0 // pred_check_branch
    %155 = sbr.rel (0) target = $region13
  $region12: #{value_net_forward.1} parent=0 // pred_region
    _
  $region13: #{value_net_forward.1} parent=0 // pred_fallthru
    _
  // Predicated region
  $region14: #{value_net_forward.1} parent=0 // pred_check
    _
  $region15: #{value_net_forward.1} parent=0 // pred_check_branch
    %157 = sbr.rel (0) target = $region17
  $region16: #{value_net_forward.1} parent=0 // pred_region
    _
  $region17: #{value_net_forward.1} parent=0 // pred_fallthru
    _

</llo_original>
